<compile_context>
chip_gen: v6e
topology: v6e:2x2x1
jax: 0.10.0
libtpu: 0.0.40
codegen_flags: <defaults>
</compile_context>

<pallas_src>
import jax
import jax.numpy as jnp
from jax.experimental import pallas as pl
from jax.experimental.pallas import tpu as pltpu


def _round_up(x: int, m: int) -> int:
    return (x + m - 1) // m * m


def _linear_kernel(x_ref, w_ref, b_ref, o_ref):
    # x_ref: (TM, K)   w_ref: (K, N)   b_ref: (1, N)   o_ref: (TM, N)
    # Canonical (M,K)x(K,N) contraction on the MXU with f32 accumulation.
    acc = jnp.dot(x_ref[...], w_ref[...], preferred_element_type=jnp.float32)
    o_ref[...] = (acc + b_ref[...]).astype(o_ref.dtype)


def prepare_spatial_embedding_params(weight, bias):
    """One-time parameter preparation (hoisted out of the per-call hot path).

    Args:
      weight: (d_model, n_channels) float  (PyTorch nn.Linear layout)
      bias:   (d_model,)            float
    Returns:
      w_t:  (n_channels, n_out)  -- transposed (and optionally lane-padded) weight
      b2d:  (1, n_out)           -- bias row
      d_model: original output feature count (for slicing if padded)
    """
    d_model, _ = weight.shape
    n_pad = _round_up(d_model, 128)
    # Lane-dense output padding only when nearly free: already >= 128 and <= 25% inflation.
    # Otherwise keep the exact d_model (store-bound kernel: don't inflate HBM write traffic).
    if d_model < 128 or 4 * n_pad > 5 * d_model:
        n_pad = d_model
    w_t = jnp.transpose(weight)  # (K, d_model); tiny one-time XLA transpose
    if n_pad != d_model:
        w_t = jnp.pad(w_t, ((0, 0), (0, n_pad - d_model)))
        bias = jnp.pad(bias, (0, n_pad - d_model))
    return w_t, bias.reshape(1, n_pad), d_model


def spatial_embedding_prepared(x, w_t, b2d, d_model, *, block_m: int = 1024, out_dtype=None):
    """Hot-path forward: x (batch, seq, n_channels) -> (batch, seq, d_model)."""
    batch, seq, K = x.shape
    kw, n_out = w_t.shape
    assert kw == K, "weight/input channel mismatch"
    M = batch * seq
    out_dtype = x.dtype if out_dtype is None else out_dtype
    itemsize = max(jnp.dtype(x.dtype).itemsize, jnp.dtype(out_dtype).itemsize)

    # --- VMEM working-set estimate using PHYSICAL tile footprints (lane->128, sublane->8). ---
    k_lanes = _round_up(K, 128)
    n_lanes = _round_up(n_out, 128)
    # Weight + bias residency (conservatively counted double-buffered).
    resident = 2 * itemsize * (_round_up(K, 8) * n_lanes + 8 * n_lanes)
    # Per-row cost of the streamed x tile + out tile, double-buffered by the pipeline.
    per_row = 2 * itemsize * (k_lanes + n_lanes)

    budget = 40 << 20  # working-set target; vmem_limit_bytes below is 48 MiB (safe on v7x's 64 MiB)
    tm = min(block_m, _round_up(M, 8))
    # Don't shrink below ~512 rows (small row tiles are latency-bound on all generations) ...
    tm_floor = min(512, _round_up(M, 8))
    while tm > tm_floor and resident + tm * per_row > budget:
        tm //= 2
    # ... unless huge d_model forces it (last resort rather than exceed scoped VMEM).
    while tm > 8 and resident + tm * per_row > budget:
        tm //= 2
    tm = max(8, (tm // 8) * 8)

    grid_m = pl.cdiv(M, tm)
    # v7x megacore: if a big problem fits one tile, split into 2 so both TensorCores get work.
    if grid_m == 1 and M >= 1024:
        tm = max(8, _round_up((M + 1) // 2, 8))
        grid_m = pl.cdiv(M, tm)

    x2d = x.reshape(M, K)

    # Note: a partial last row-tile reads out-of-bounds x rows (garbage); Pallas discards the
    # corresponding out-of-bounds output rows, so the result is correct.
    out = pl.pallas_call(
        _linear_kernel,
        out_shape=jax.ShapeDtypeStruct((M, n_out), out_dtype),
        grid=(grid_m,),
        in_specs=[
            pl.BlockSpec((tm, K), lambda i: (i, 0)),      # x: streamed over row tiles
            pl.BlockSpec((K, n_out), lambda i: (0, 0)),   # weight: fetched once, VMEM-resident
            pl.BlockSpec((1, n_out), lambda i: (0, 0)),   # bias:   fetched once, VMEM-resident
        ],
        out_specs=pl.BlockSpec((tm, n_out), lambda i: (i, 0)),
        compiler_params=pltpu.CompilerParams(
            dimension_semantics=("parallel",),   # independent row tiles -> megacore-shardable
            vmem_limit_bytes=48 << 20,           # explicit: v5e default is only 16 MiB scoped
        ),
    )(x2d, w_t, b2d)

    if n_out != d_model:
        out = out[:, :d_model]
    return out.reshape(batch, seq, d_model)


def spatial_embedding(x, weight, bias, *, block_m: int = 1024, out_dtype=None):
    """Convenience wrapper (prep + forward). In a real model, call
    prepare_spatial_embedding_params once and reuse its outputs per step."""
    w_t, b2d, d_model = prepare_spatial_embedding_params(weight, bias)
    return spatial_embedding_prepared(x, w_t, b2d, d_model, block_m=block_m, out_dtype=out_dtype)


def spatial_embedding_ref(x, weight, bias):
    # Pure-JAX reference matching torch.nn.Linear semantics.
    return jnp.einsum("bsc,dc->bsd", x, weight) + bias


if __name__ == "__main__":
    batch, seq, n_channels, d_model = 2, 8, 4, 32

    key = jax.random.PRNGKey(0)
    kx, kw, kb = jax.random.split(key, 3)

    x = jax.random.normal(kx, (batch, seq, n_channels), dtype=jnp.float32)
    # Deterministic synthetic parameters (PyTorch nn.Linear shapes).
    weight = jax.random.normal(kw, (d_model, n_channels), dtype=jnp.float32) * 0.1
    bias = jax.random.normal(kb, (d_model,), dtype=jnp.float32) * 0.1

    y = spatial_embedding(x, weight, bias)
    y = jax.block_until_ready(y)

    y_ref = spatial_embedding_ref(x, weight, bias)
    assert y.shape == (batch, seq, d_model)
    assert jnp.allclose(y, y_ref, atol=1e-5, rtol=1e-5)

    print("KERNEL_OK")
</pallas_src>

<mosaic_0001>
module attributes {stable_mosaic.version = 11 : i64} {
  func.func @_linear_kernel(%arg0: i32, %arg1: memref<16x4xf32, #tpu.memory_space<vmem>>, %arg2: memref<4x32xf32, #tpu.memory_space<vmem>>, %arg3: memref<1x32xf32, #tpu.memory_space<vmem>>, %arg4: memref<16x32xf32, #tpu.memory_space<vmem>>) attributes {dimension_semantics = [#tpu.dimension_semantics<parallel>], iteration_bounds = array<i64: 1>, scalar_prefetch = 0 : i64, scratch_operands = 0 : i64, tpu.core_type = #tpu.core_type<tc>, window_params = [{transform_indices = @transform_0, window_bounds = array<i64: 16, 4>}, {pipeline_mode = #tpu.pipeline_mode<synchronous>, transform_indices = @transform_1, window_bounds = array<i64: 4, 32>}, {pipeline_mode = #tpu.pipeline_mode<synchronous>, transform_indices = @transform_2, window_bounds = array<i64: 1, 32>}, {transform_indices = @transform_3, window_bounds = array<i64: 16, 32>}]} {
    %c0 = arith.constant 0 : index
    %c0_0 = arith.constant 0 : index
    %0 = vector.load %arg1[%c0, %c0_0] : memref<16x4xf32, #tpu.memory_space<vmem>>, vector<16x4xf32>
    %c0_1 = arith.constant 0 : index
    %c0_2 = arith.constant 0 : index
    %1 = vector.load %arg2[%c0_1, %c0_2] : memref<4x32xf32, #tpu.memory_space<vmem>>, vector<4x32xf32>
    %cst = arith.constant dense<0.000000e+00> : vector<16x32xf32>
    %2 = tpu.matmul %0, %1, %cst {dimension_numbers = #tpu.dot_dimension_numbers<[1], [0], [0], [1], [0, 0, 1, 1], [], []>} : vector<16x4xf32>, vector<4x32xf32>, vector<16x32xf32> -> vector<16x32xf32>
    %c0_3 = arith.constant 0 : index
    %c0_4 = arith.constant 0 : index
    %3 = vector.load %arg3[%c0_3, %c0_4] : memref<1x32xf32, #tpu.memory_space<vmem>>, vector<1x32xf32>
    %4 = vector.broadcast %3 : vector<1x32xf32> to vector<16x32xf32>
    %5 = arith.addf %2, %4 : vector<16x32xf32>
    %c0_5 = arith.constant 0 : index
    %c0_6 = arith.constant 0 : index
    %6 = vector.load %arg4[%c0_5, %c0_6] : memref<16x32xf32, #tpu.memory_space<vmem>>, vector<16x32xf32>
    tpu.vector_store %arg4[%c0_5, %c0_6], %5 {strides = array<i32>} : memref<16x32xf32, #tpu.memory_space<vmem>>, vector<16x32xf32>,
    return
  }
  func.func @transform_0(%arg0: i32) -> (i32, i32) {
    %c0_i32 = arith.constant 0 : i32
    %c0_i32_0 = arith.constant 0 : i32
    return %arg0, %c0_i32 : i32, i32
  }
  func.func @transform_1(%arg0: i32) -> (i32, i32) {
    %c0_i32 = arith.constant 0 : i32
    %c0_i32_0 = arith.constant 0 : i32
    %c0_i32_1 = arith.constant 0 : i32
    return %c0_i32, %c0_i32_0 : i32, i32
  }
  func.func @transform_2(%arg0: i32) -> (i32, i32) {
    %c0_i32 = arith.constant 0 : i32
    %c0_i32_0 = arith.constant 0 : i32
    %c0_i32_1 = arith.constant 0 : i32
    return %c0_i32, %c0_i32_0 : i32, i32
  }
  func.func @transform_3(%arg0: i32) -> (i32, i32) {
    %c0_i32 = arith.constant 0 : i32
    %c0_i32_0 = arith.constant 0 : i32
    return %arg0, %c0_i32 : i32, i32
  }
}

</mosaic_0001>

<llo_original>
// kernel: tpu_custom_call.1
$region0: #{tpu_custom_call.1}
  #allocation0 [shape = 'u32[]', space=smem, size = 0x4, offset = 0x4, fixed_abs, tag = 'smem constant byte address 0x4 - core index']
  #allocation1 [shape = 'u32[144,128]{1,0:T(1,128)}', space=vmem, size = 0x12000, scoped, tag = 'internal scratch']
  %s0 = inlined_call_operand.vmem [shape: f32[16,4], index: 0, kind: input, shape index: {}]
  %s1 = inlined_call_operand.vmem [shape: f32[4,32], index: 1, kind: input, shape index: {}]
  %s2 = inlined_call_operand.vmem [shape: f32[1,32], index: 2, kind: input, shape index: {}]
  %s3 = inlined_call_operand.hbm [shape: f32[16,32], index: 3, kind: output, shape index: {}]
  %s4 = sld [smem:[#allocation0]]
  $region22: #{tpu_custom_call.1} parent=0
    _
  %s6 = ssub.s32 1, %s4
  %s7 = scalar_select 0, %s6, %s4
  $region1: #{tpu_custom_call.1} parent=0
    #allocation2 [shape = 'u8[8192]{0}', space=vmem, size = 0x2000, scoped, tag = 'output window, operand 0, single buffered']
    #allocation3 [shape = 's32[1]{0}', space=sflag, size = 0x4, scoped, tag = 'scoped memory for tpu_custom_call.1']
    %8 = vsyncpa [#allocation3], 0
    // Predicated region
    $region2: #{tpu_custom_call.1} parent=1 // pred_check
      _
    $region3: #{tpu_custom_call.1} parent=1 // pred_check_branch
      %10 = sbr.rel (0) target = $region5
    $region4: #{tpu_custom_call.1} parent=1 // pred_region
      _
    $region5: #{tpu_custom_call.1} parent=1 // pred_fallthru
      _
    // Predicated region
    $region6: #{tpu_custom_call.1} parent=1 // pred_check
      _
    $region7: #{tpu_custom_call.1} parent=1 // pred_check_branch
      %12 = sbr.rel (0) target = $region9
    $region8: #{tpu_custom_call.1} parent=1 // pred_region
      _
    $region9: #{tpu_custom_call.1} parent=1 // pred_fallthru
      _
    // Predicated region
    $region10: #{tpu_custom_call.1} parent=1 // pred_check
      _
    $region11: #{tpu_custom_call.1} parent=1 // pred_check_branch
      %14 = sbr.rel (0) target = $region13
    $region12: #{tpu_custom_call.1} parent=1 // pred_region
      _
    $region13: #{tpu_custom_call.1} parent=1 // pred_fallthru
      _
    %v15 = vld [vmem:[%s0] sm:$0xff]
    %v16 = vld [vmem:[%s0 + $0x8] sm:$0xff]
    %v17 = vld [vmem:[%s1] sm:$0xf]
    %v18 = vld [vmem:[%s2] sm:$0x1]
    %v20 = vlaneseq
    %v21 = vshrl.u32 %v20, 7
    %v22 = vsub.s32 0, %v21
    %v23 = vrot.slane %v18, %v22
    %vm25 = vcmask 31744
    %v27 = vsel %vm25, %v15, 0
    %v30 = vsel %vm25, %v16, 0
    %vm32 = vcmask 1043456
    %v34 = vsel %vm32, %v17, 0
    %36 = vmatprep.subr.mxu0 0.0
    %37 = vmatpush1.msra.mxu0 0.0
    %38 = vmatprep.subr.mxu0 0.0
    %39 = vmatpush1.msra.mxu0 0.0
    %40 = vmatprep.subr.mxu0 0.0
    %41 = vmatpush1.msra.mxu0 0.0
    %42 = vmatprep.subr.mxu0 0.0
    %43 = vmatpush1.msra.mxu0 0.0
    %44 = vmatprep.subr.mxu0 0.0
    %45 = vmatpush1.msra.mxu0 0.0
    %46 = vmatprep.subr.mxu0 0.0
    %47 = vmatpush1.msra.mxu0 0.0
    %48 = vmatprep.subr.mxu0 0.0
    %49 = vmatpush1.msra.mxu0 0.0
    %50 = vmatprep.subr.mxu0 0.0
    %51 = vmatpush1.msra.mxu0 0.0
    %52 = vmatprep.subr.mxu0 0.0
    %53 = vmatpush1.msra.mxu0 0.0
    %54 = vmatprep.subr.mxu0 0.0
    %55 = vmatpush1.msra.mxu0 0.0
    %56 = vmatprep.subr.mxu0 0.0
    %57 = vmatpush1.msra.mxu0 0.0
    %58 = vmatprep.subr.mxu0 0.0
    %59 = vmatpush1.msra.mxu0 0.0
    %60 = vmatprep.subr.mxu0 0.0
    %61 = vmatpush1.msra.mxu0 0.0
    %62 = vmatprep.subr.mxu0 0.0
    %63 = vmatpush1.msra.mxu0 0.0
    %64 = vmatprep.subr.mxu0 0.0
    %65 = vmatpush1.msra.mxu0 0.0
    %66 = vmatprep.subr.mxu0 0.0
    %67 = vmatpush1.msra.mxu0 %v34
    %68 = vmatprep.subr.mxu0 0.0
    %69 = vmatpush2.msra.mxu0 0.0
    %70 = vmatprep.subr.mxu0 0.0
    %71 = vmatpush2.msra.mxu0 0.0
    %72 = vmatprep.subr.mxu0 0.0
    %73 = vmatpush2.msra.mxu0 0.0
    %74 = vmatprep.subr.mxu0 0.0
    %75 = vmatpush2.msra.mxu0 0.0
    %76 = vmatprep.subr.mxu0 0.0
    %77 = vmatpush2.msra.mxu0 0.0
    %78 = vmatprep.subr.mxu0 0.0
    %79 = vmatpush2.msra.mxu0 0.0
    %80 = vmatprep.subr.mxu0 0.0
    %81 = vmatpush2.msra.mxu0 0.0
    %82 = vmatprep.subr.mxu0 0.0
    %83 = vmatpush2.msra.mxu0 0.0
    %84 = vmatprep.subr.mxu0 0.0
    %85 = vmatpush2.msra.mxu0 0.0
    %86 = vmatprep.subr.mxu0 0.0
    %87 = vmatpush2.msra.mxu0 0.0
    %88 = vmatprep.subr.mxu0 0.0
    %89 = vmatpush2.msra.mxu0 0.0
    %90 = vmatprep.subr.mxu0 0.0
    %91 = vmatpush2.msra.mxu0 0.0
    %92 = vmatprep.subr.mxu0 0.0
    %93 = vmatpush2.msra.mxu0 0.0
    %94 = vmatprep.subr.mxu0 0.0
    %95 = vmatpush2.msra.mxu0 0.0
    %96 = vmatprep.subr.mxu0 0.0
    %97 = vmatpush2.msra.mxu0 0.0
    %98 = vmatprep.subr.mxu0 0.0
    %99 = vmatpush2.msra.mxu0 0.0
    %100 = vmatprep.mubr.f32.mxu0 0.0
    %101 = vmatmul.mubr.f32.gmra.mxu0 %v27
    %v102 = vpop.f32.mrf.mxu0
    %v103 = vadd.f32 %v23, %v102
    %v104 = vpop.f32.mrf.mxu0
    %105 = vmatprep.mubr.f32.mxu0 0.0
    %106 = vmatmul.mubr.f32.gmra.mxu0 %v30
    %v107 = vpop.f32.mrf.mxu0
    %v108 = vadd.f32 %v23, %v107
    %v109 = vpop.f32.mrf.mxu0
    %110 = vdwg.mxu0
    %vm111 = vcmask 261120
    %112 = vst.msk [vmem:[#allocation2] sm:$0xff] %vm111, %v103
    %113 = vst.msk [vmem:[#allocation2 + $0x8] sm:$0xff] %vm111, %v108
    // Predicated region
    $region14: #{tpu_custom_call.1} parent=1 // pred_check
      _
    $region15: #{tpu_custom_call.1} parent=1 // pred_check_branch
      %115 = sbr.rel (0) target = $region17
    $region16: #{tpu_custom_call.1} parent=1 // pred_region
      %s117 = ssub.s32 256, 256
      %118 = vsyncadd [#allocation3], %s117
      %s119 = sshll.u32 [#allocation2], 4
      %s120 = int_to_ptr.vmem [resolvable:$true] %s119
      %125 = dma.vmem_to_hbm [thread:$0]  %s120, 256, %s3, [#allocation3], 128, 128, 8
    $region17: #{tpu_custom_call.1} parent=1 // pred_fallthru
      _
    // Predicated region
    $region18: #{tpu_custom_call.1} parent=1 // pred_check
      _
    $region19: #{tpu_custom_call.1} parent=1 // pred_check_branch
      %127 = sbr.rel (0) target = $region21
    $region20: #{tpu_custom_call.1} parent=1 // pred_region
      %128 = dma.done [#allocation3], 256
    $region21: #{tpu_custom_call.1} parent=1 // pred_fallthru
      _
    %129 = vsyncpa [#allocation3], 1

</llo_original>
